<compile_context>
chip_gen: v6e
topology: v6e:2x2x1
jax: 0.10.0
libtpu: 0.0.40
codegen_flags: <defaults>
</compile_context>

<pallas_src>
import functools

import jax
import jax.numpy as jnp
from jax.experimental import pallas as pl
from jax.experimental.pallas import tpu as pltpu


def _round_up(n: int, m: int) -> int:
    return ((n + m - 1) // m) * m


def _round_down(n: int, m: int) -> int:
    return (n // m) * m


_TARGET_BLOCK_BYTES = 2 * 1024 * 1024  # ~2 MiB output block per grid step


# --------------------- lane-dense (transposed) kernel: d_half < 128 ----------------
def _pe_kernel_lanes(x_ref, div_ref, out_ref, *, d_half: int):
    # x_ref:   [1, TL]         flattened elements ride the lane axis
    # div_ref: [d_half, TL]    resident frequency tile (constant index_map)
    # out_ref: [2*d_half, TL]  sin rows on top, cos rows below (compact, no padding)
    tmp = x_ref[...] * div_ref[...]          # sublane-broadcast of x (cheap), lane-dense
    s = jnp.sin(tmp)
    c = jnp.cos(tmp)
    if d_half % 8 == 0:                      # static branch: aligned sublane stores
        out_ref[:d_half, :] = s
        out_ref[d_half:, :] = c
    else:
        out_ref[...] = jnp.concatenate([s, c], axis=0)


# --------------------- row-major kernel: d_half >= 128 -----------------------------
def _pe_kernel_rows(x_ref, div_ref, out_ref, *, d_half: int):
    # x_ref:   [TR, 1]
    # div_ref: [1, d_half]                   resident frequency row
    # out_ref: [TR, round_up(2*d_half,128)]  sin|cos packed adjacently
    tmp = x_ref[...] * div_ref[...]          # [TR,1] x [1,d_half] -> [TR,d_half]
    out_ref[:, :d_half] = jnp.sin(tmp)
    out_ref[:, d_half:2 * d_half] = jnp.cos(tmp)


@functools.partial(jax.jit, static_argnames=("d_model", "M"))
def positional_encoding_vector(x, d_model: int, M: float):
    """Pallas TPU implementation of PositionalEncodingVector.forward."""
    d_half = len(range(0, d_model, 2))
    dm2 = 2 * d_half
    lead_shape = x.shape
    r = 1
    for s in lead_shape:
        r *= int(s)

    div_term = 1.0 / (
        float(M) ** (2.0 * jnp.arange(0, d_model, 2, dtype=jnp.float32) / float(d_model))
    )

    if r == 0:  # empty input guard
        return jnp.zeros((*lead_shape, dm2), jnp.float32)

    if d_half < 128:
        # ---------- transposed, lane-dense path ----------
        tl = max(128, min(2048, _round_down(_TARGET_BLOCK_BYTES // (dm2 * 4), 128)))
        tl = min(tl, _round_up(r, 128))
        # keep >= 2 grid steps so v7x's two TensorCores both get work
        if tl > 128 and _round_up(r, tl) // tl < 2:
            tl = max(128, _round_up((r + 1) // 2, 128))
        r_pad = _round_up(r, tl)

        x_lanes = jnp.pad(
            x.reshape(1, r).astype(jnp.float32), ((0, 0), (0, r_pad - r))
        )
        div_tile = jnp.broadcast_to(div_term[:, None], (d_half, tl))

        out_t = pl.pallas_call(
            functools.partial(_pe_kernel_lanes, d_half=d_half),
            out_shape=jax.ShapeDtypeStruct((dm2, r_pad), jnp.float32),
            grid_spec=pltpu.PrefetchScalarGridSpec(
                num_scalar_prefetch=0,
                grid=(r_pad // tl,),
                in_specs=[
                    pl.BlockSpec((1, tl), lambda i: (0, i)),       # streamed x lanes
                    pl.BlockSpec((d_half, tl), lambda i: (0, 0)),  # resident div tile
                ],
                out_specs=pl.BlockSpec((dm2, tl), lambda i: (0, i)),
            ),
            compiler_params=pltpu.CompilerParams(
                dimension_semantics=("parallel",)
            ),
        )(x_lanes, div_tile)

        # Layout plumbing only (fused under jit): drop padded columns, transpose back.
        out = out_t[:, :r].T
        return out.reshape(*lead_shape, dm2)

    # ---------- row-major path (large d_half) ----------
    wp = _round_up(dm2, 128)  # == dm2 whenever d_half % 64 == 0 (no padding)
    tr = max(8, min(2048, _round_down(_TARGET_BLOCK_BYTES // (wp * 4), 8)))
    tr = min(tr, _round_up(r, 8))
    if tr > 8 and _round_up(r, tr) // tr < 2:
        tr = max(8, _round_up((r + 1) // 2, 8))
    r_pad = _round_up(r, tr)

    x_col = jnp.pad(x.reshape(r, 1).astype(jnp.float32), ((0, r_pad - r), (0, 0)))
    div_row = div_term.reshape(1, d_half)

    out_pad = pl.pallas_call(
        functools.partial(_pe_kernel_rows, d_half=d_half),
        out_shape=jax.ShapeDtypeStruct((r_pad, wp), jnp.float32),
        grid_spec=pltpu.PrefetchScalarGridSpec(
            num_scalar_prefetch=0,
            grid=(r_pad // tr,),
            in_specs=[
                pl.BlockSpec((tr, 1), lambda i: (i, 0)),        # streamed x rows
                pl.BlockSpec((1, d_half), lambda i: (0, 0)),    # resident div row
            ],
            out_specs=pl.BlockSpec((tr, wp), lambda i: (i, 0)),
        ),
        compiler_params=pltpu.CompilerParams(
            dimension_semantics=("parallel",)
        ),
    )(x_col, div_row)

    if wp == dm2 and r_pad == r:
        return out_pad.reshape(*lead_shape, dm2)                # pure reshape fast path
    return out_pad[:r, :dm2].reshape(*lead_shape, dm2)


def positional_encoding_vector_ref(x, d_model: int, M: float):
    """Plain-JAX reference mirroring the PyTorch module."""
    div_term = 1.0 / (
        float(M) ** (2.0 * jnp.arange(0, d_model, 2, dtype=jnp.float32) / float(d_model))
    )
    tmp = x.astype(jnp.float32)[..., None] * div_term
    return jnp.concatenate([jnp.sin(tmp), jnp.cos(tmp)], axis=-1)


if __name__ == "__main__":
    SEQ, BATCH, EMB = 8, 2, 16          # x: [seq_len, batch_size, embedding_dim]
    D_MODEL, M = 32, 10000.0

    key = jax.random.PRNGKey(0)
    x = jax.random.normal(key, (SEQ, BATCH, EMB), dtype=jnp.float32)

    out = positional_encoding_vector(x, D_MODEL, M)
    out = jax.block_until_ready(out)

    ref = positional_encoding_vector_ref(x, D_MODEL, M)
    assert out.shape == (SEQ, BATCH, EMB, D_MODEL), out.shape
    assert jnp.allclose(out, ref, atol=1e-4, rtol=1e-4), float(
        jnp.max(jnp.abs(out - ref))
    )

    print("KERNEL_OK")
</pallas_src>

<mosaic_0001>
module attributes {stable_mosaic.version = 11 : i64} {
  func.func @_pe_kernel_lanes(%arg0: i32, %arg1: memref<1x128xf32, #tpu.memory_space<vmem>>, %arg2: memref<16x128xf32, #tpu.memory_space<vmem>>, %arg3: memref<32x128xf32, #tpu.memory_space<vmem>>) attributes {dimension_semantics = [#tpu.dimension_semantics<parallel>], iteration_bounds = array<i64: 2>, scalar_prefetch = 0 : i64, scratch_operands = 0 : i64, tpu.core_type = #tpu.core_type<tc>, window_params = [{transform_indices = @transform_0, window_bounds = array<i64: 1, 128>}, {pipeline_mode = #tpu.pipeline_mode<synchronous>, transform_indices = @transform_1, window_bounds = array<i64: 16, 128>}, {transform_indices = @transform_2, window_bounds = array<i64: 32, 128>}]} {
    %c0 = arith.constant 0 : index
    %c0_0 = arith.constant 0 : index
    %0 = vector.load %arg1[%c0, %c0_0] : memref<1x128xf32, #tpu.memory_space<vmem>>, vector<1x128xf32>
    %c0_1 = arith.constant 0 : index
    %c0_2 = arith.constant 0 : index
    %1 = vector.load %arg2[%c0_1, %c0_2] : memref<16x128xf32, #tpu.memory_space<vmem>>, vector<16x128xf32>
    %2 = vector.broadcast %0 : vector<1x128xf32> to vector<16x128xf32>
    %3 = arith.mulf %2, %1 : vector<16x128xf32>
    %4 = math.sin %3 : vector<16x128xf32>
    %5 = math.cos %3 : vector<16x128xf32>
    %c0_3 = arith.constant 0 : index
    %c0_4 = arith.constant 0 : index
    %6 = vector.load %arg3[%c0_3, %c0_4] : memref<32x128xf32, #tpu.memory_space<vmem>>, vector<16x128xf32>
    tpu.vector_store %arg3[%c0_3, %c0_4], %4 {strides = array<i32>} : memref<32x128xf32, #tpu.memory_space<vmem>>, vector<16x128xf32>,
    %c16 = arith.constant 16 : index
    %c0_5 = arith.constant 0 : index
    %7 = vector.load %arg3[%c16, %c0_5] : memref<32x128xf32, #tpu.memory_space<vmem>>, vector<16x128xf32>
    tpu.vector_store %arg3[%c16, %c0_5], %5 {strides = array<i32>} : memref<32x128xf32, #tpu.memory_space<vmem>>, vector<16x128xf32>,
    return
  }
  func.func @transform_0(%arg0: i32) -> (i32, i32) {
    %c0_i32 = arith.constant 0 : i32
    %c0_i32_0 = arith.constant 0 : i32
    return %c0_i32, %arg0 : i32, i32
  }
  func.func @transform_1(%arg0: i32) -> (i32, i32) {
    %c0_i32 = arith.constant 0 : i32
    %c0_i32_0 = arith.constant 0 : i32
    %c0_i32_1 = arith.constant 0 : i32
    return %c0_i32, %c0_i32_0 : i32, i32
  }
  func.func @transform_2(%arg0: i32) -> (i32, i32) {
    %c0_i32 = arith.constant 0 : i32
    %c0_i32_0 = arith.constant 0 : i32
    return %c0_i32, %arg0 : i32, i32
  }
}

</mosaic_0001>

<llo_original>
// kernel: positional_encoding_vector.1
$region0: #{positional_encoding_vector.1}
  #allocation0 [shape = 'u32[]', space=smem, size = 0x4, offset = 0x4, fixed_abs, tag = 'smem constant byte address 0x4 - core index']
  #allocation1 [shape = 'u32[144,128]{1,0:T(1,128)}', space=vmem, size = 0x12000, scoped, tag = 'internal scratch']
  %s0 = inlined_call_operand.vmem [shape: f32[1,256], index: 0, kind: input, shape index: {}]
  %s1 = inlined_call_operand.vmem [shape: f32[16,128], index: 1, kind: input, shape index: {}]
  %s2 = inlined_call_operand.vmem [shape: f32[32,256], index: 2, kind: output, shape index: {}]
  %s3 = sld [smem:[#allocation0]]
  $region75: #{positional_encoding_vector.1} parent=0
    _
  %s5 = ssub.s32 1, %s3
  %s6 = scalar_select 0, %s5, %s3
  $region1: #{positional_encoding_vector.1} parent=0
    #allocation2 [shape = 'u8[32768]{0}', space=vmem, size = 0x8000, scoped, tag = 'output window, operand 0']
    loop: start=0, step=1, limit=4
    $region2: #{positional_encoding_vector.1} parent=1 // loop_pre_header
      _
    $region3: #{positional_encoding_vector.1} parent=1 // loop_header
      %s8 = sphi 0, %s12
      %p9 = scmp.ge.s32.totalorder %s8, 4
      %s18 = sphi 0, %s20
      %s21 = sphi 0, %s18
      %s22 = sphi 0, %s21
      %s38 = sphi 0, %s22
      %s42 = sphi 0, %s42
      %s44 = sphi 0, %s42
      %s45 = sphi 0, %s44
      %s59 = sphi 0, %s45
      %s65 = sphi 0, %s67
      %s68 = sphi 0, %s65
      %s69 = sphi 0, %s68
      %s85 = sphi 0, %s69
    $region4: #{positional_encoding_vector.1} parent=1 // loop_header_branch
      %11 = sbr.rel (%p9) target = $region8
    $region5: #{positional_encoding_vector.1} parent=1 // loop_body
      %s13 = ssub.s32 %s8, 1
      %s14 = ssub.s32 %s8, 2
      %s15 = sadd.s32 %s8, 1
      %s16 = ssub.s32 %s8, %s15
      %p17 = scmp.eq.s32.totalorder %s16, 0
      %s19 = sadd.s32 %s18, 1
      %s20 = scalar_select %p17, %s18, %s19
      %p23 = pneg %p17
      %p24 = scmp.eq.s32.totalorder %s8, 1
      %p25 = por %p23, %p24
      %p26 = scmp.ne.s32.totalorder %s18, %s21
      %p27 = scmp.eq.s32.totalorder %s8, 0
      %p28 = por %p26, %p27
      %p29 = scmp.ne.s32.totalorder %s18, %s21
      %p30 = scmp.eq.s32.totalorder %s13, 1
      %p31 = por %p29, %p30
      %p32 = scmp.ne.s32.totalorder %s21, %s22
      %p33 = scmp.eq.s32.totalorder %s13, 0
      %p34 = por %p32, %p33
      %p35 = scmp.ne.s32.totalorder %s21, %s22
      %p36 = scmp.eq.s32.totalorder %s14, 1
      %p37 = por %p35, %p36
      %p39 = scmp.ne.s32.totalorder %s22, %s38
      %p40 = scmp.eq.s32.totalorder %s14, 0
      %p41 = por %p39, %p40
      %s43 = sadd.s32 %s42, 1
      %p46 = scmp.eq.s32.totalorder %s8, 1
      %p47 = scmp.ne.s32.totalorder %s42, %s44
      %p48 = scmp.eq.s32.totalorder %s8, 0
      %p49 = por %p47, %p48
      %p50 = scmp.ne.s32.totalorder %s42, %s44
      %p51 = scmp.eq.s32.totalorder %s13, 1
      %p52 = por %p50, %p51
      %p53 = scmp.ne.s32.totalorder %s44, %s45
      %p54 = scmp.eq.s32.totalorder %s13, 0
      %p55 = por %p53, %p54
      %p56 = scmp.ne.s32.totalorder %s44, %s45
      %p57 = scmp.eq.s32.totalorder %s14, 1
      %p58 = por %p56, %p57
      %p60 = scmp.ne.s32.totalorder %s45, %s59
      %p61 = scmp.eq.s32.totalorder %s14, 0
      %p62 = por %p60, %p61
      %s63 = ssub.s32 %s8, %s15
      %p64 = scmp.eq.s32.totalorder %s63, 0
      %s66 = sadd.s32 %s65, 1
      %s67 = scalar_select %p64, %s65, %s66
      %p70 = pneg %p64
      %p71 = scmp.eq.s32.totalorder %s8, 1
      %p72 = por %p70, %p71
      %p73 = scmp.ne.s32.totalorder %s65, %s68
      %p74 = scmp.eq.s32.totalorder %s8, 0
      %p75 = por %p73, %p74
      %p76 = scmp.ne.s32.totalorder %s65, %s68
      %p77 = scmp.eq.s32.totalorder %s13, 1
      %p78 = por %p76, %p77
      %p79 = scmp.ne.s32.totalorder %s68, %s69
      %p80 = scmp.eq.s32.totalorder %s13, 0
      %p81 = por %p79, %p80
      %p82 = scmp.ne.s32.totalorder %s68, %s69
      %p83 = scmp.eq.s32.totalorder %s14, 1
      %p84 = por %p82, %p83
      %p86 = scmp.ne.s32.totalorder %s69, %s85
      %p87 = scmp.eq.s32.totalorder %s14, 0
      %p88 = por %p86, %p87
      %p89 = scmp.le.s32.totalorder 1, %s8
      %p90 = scmp.lt.s32.totalorder %s8, 3
      %p91 = pnand %p89, %p90
      %p92 = pneg %p91
      // Predicated region
      $region9: #{positional_encoding_vector.1} parent=5 // pred_check
        _
      $region10: #{positional_encoding_vector.1} parent=5 // pred_check_branch
        %94 = sbr.rel (%p91) target = $region12
      $region11: #{positional_encoding_vector.1} parent=5 // pred_region
        %s95 = ssub.s32 %s8, 1
        // Predicated region
        $region13: #{positional_encoding_vector.1} parent=11 // pred_check
          %p96 = pneg %p55
        $region14: #{positional_encoding_vector.1} parent=11 // pred_check_branch
          %98 = sbr.rel (%p96) target = $region16
        $region15: #{positional_encoding_vector.1} parent=11 // pred_region
          _
        $region16: #{positional_encoding_vector.1} parent=11 // pred_fallthru
          _
      $region12: #{positional_encoding_vector.1} parent=5 // pred_fallthru
        _
      %p99 = scmp.lt.s32.totalorder %s8, 2
      // Predicated region
      $region17: #{positional_encoding_vector.1} parent=5 // pred_check
        %p100 = pneg %p99
      $region18: #{positional_encoding_vector.1} parent=5 // pred_check_branch
        %102 = sbr.rel (%p100) target = $region20
      $region19: #{positional_encoding_vector.1} parent=5 // pred_region
        // Predicated region
        $region21: #{positional_encoding_vector.1} parent=19 // pred_check
          %p103 = pneg %p28
        $region22: #{positional_encoding_vector.1} parent=19 // pred_check_branch
          %105 = sbr.rel (%p103) target = $region24
        $region23: #{positional_encoding_vector.1} parent=19 // pred_region
          %p106 = scmp.lt.s32.totalorder %s8, 1
          %s107 = scalar_select %p106, %s8, 1
          %s108 = scalar_lea.vmem %s0, %s107
        $region24: #{positional_encoding_vector.1} parent=19 // pred_fallthru
          _
      $region20: #{positional_encoding_vector.1} parent=5 // pred_fallthru
        _
      %p109 = scmp.le.s32.totalorder 1, %s8
      %p110 = scmp.lt.s32.totalorder %s8, 3
      %p111 = pnand %p109, %p110
      %p112 = pneg %p111
      // Predicated region
      $region25: #{positional_encoding_vector.1} parent=5 // pred_check
        _
      $region26: #{positional_encoding_vector.1} parent=5 // pred_check_branch
        %114 = sbr.rel (%p111) target = $region28
      $region27: #{positional_encoding_vector.1} parent=5 // pred_region
        %s115 = ssub.s32 %s8, 1
        %p116 = scmp.lt.s32.totalorder %s13, 1
        %s117 = scalar_select %p116, %s13, 1
        %s118 = scalar_lea.vmem %s0, %s117
        %p119 = pneg %p34
        %p120 = pneg %p31
        %p121 = pneg %p55
        %p122 = pneg %p52
        %p123 = pneg %p81
        %p124 = pneg %p78
        %s125 = sand.u32 %s68, 1
        %s126 = sand.u32 %s68, 1
        %s127 = smul.addr %s126, 32
        %s128 = scalar_lea.vmem [#allocation2], %s127
        %p129 = scmp.lt.s32.totalorder %s13, 1
        %s130 = scalar_select %p129, %s13, 1
        %s131 = scalar_lea.vmem %s0, %s130
        %v132 = vld [vmem:[%s131] sm:$0x1]
        %v133 = vld [vmem:[%s1] sm:$0xff]
        %v134 = vld [vmem:[%s1 + $0x8] sm:$0xff]
        %v136 = vlaneseq
        %v137 = vshrl.u32 %v136, 7
        %v138 = vsub.s32 0, %v137
        %v139 = vrot.slane %v132, %v138
        %v141 = vmul.f32 %v139, %v133
        %v142 = vmul.f32 %v139, %v134
        %v143 = vand.u32 2147483647, %v141
        %vm144 = vcmp.le.f32.partialorder %v143, 0.7853982
        %vm145 = vcmp.lt.s32.totalorder %v141, 0
        %v146 = vand.u32 %v141, 2139095040
        %v147 = vshrl.u32 %v146, 23
        %v148 = vsub.s32 %v147, 127
        %v149 = vand.u32 2147483647, %v141
        %v150 = vand.u32 %v149, 8388607
        %v151 = vor.u32 %v150, 8388608
        %v152 = vsub.s32 0, %v151
        %v153 = vadd.s32 %v148, 1
        %vm154 = vcmp.gt.s32.totalorder %v153, 0
        %v155 = vsel %vm154, %v153, 0
        %v156 = vshrl.u32 %v155, 5
        %v157 = vand.u32 %v155, 31
        %v158 = vsub.s32 32, %v157
        %v159 = vshrl.u32 683565275, %v158
        %v160 = vshll.u32 683565275, %v157
        %v161 = vshrl.u32 2475754826, %v158
        %v162 = vor.u32 %v160, %v161
        %v163 = vshll.u32 2475754826, %v157
        %v164 = vshrl.u32 2131351028, %v158
        %v165 = vor.u32 %v163, %v164
        %v166 = vshll.u32 2131351028, %v157
        %v167 = vshrl.u32 2102212464, %v158
        %v168 = vor.u32 %v166, %v167
        %v169 = vshll.u32 2102212464, %v157
        %v170 = vshrl.u32 920167782, %v158
        %v171 = vor.u32 %v169, %v170
        %v172 = vshll.u32 920167782, %v157
        %v173 = vshrl.u32 1326507024, %v158
        %v174 = vor.u32 %v172, %v173
        %vm175 = vcmp.lt.s32.totalorder %v156, 1
        %vm176 = vcmp.lt.s32.totalorder %v156, 2
        %vm177 = vcmp.lt.s32.totalorder %v156, 3
        %vm178 = vcmp.lt.s32.totalorder %v156, 4
        %v179 = vsel %vm175, %v159, %v162
        %v180 = vsel %vm178, %v168, 2102212464
        %v181 = vsel %vm177, %v165, %v180
        %v182 = vsel %vm176, %v179, %v181
        %v183 = vsel %vm175, %v162, %v165
        %v184 = vsel %vm178, %v171, 920167782
        %v185 = vsel %vm177, %v168, %v184
        %v186 = vsel %vm176, %v183, %v185
        %v187 = vsel %vm175, %v165, %v168
        %v188 = vsel %vm178, %v174, 1326507024
        %v189 = vsel %vm177, %v171, %v188
        %v190 = vsel %vm176, %v187, %v189
        %v191 = vshll.u32 %v151, 8
        %v192 = vmul.u32.u64.compose %v191, %v190
        %v193 = vextract.low.u32 %v192
        %v194 = vextract.high.u32 %v192
        %v195 = vmul.u32.u64.compose %v191, %v186
        %v196 = vextract.low.u32 %v195
        %v197 = vextract.high.u32 %v195
        %v198 = vmul.u32 %v191, %v182
        %v199 = vadd.s32 %v194, %v196
        %vm200 = vc.u32 %v194, %v196
        %v201 = vadd.s32 %v197, 1
        %v202 = vsel %vm200, %v201, %v197
        %v203 = vadd.s32 %v198, %v202
        %v204 = vadd.s32 %v203, 536870912
        %v205 = vshrl.u32 %v204, 30
        %v206 = vshll.u32 %v205, 30
        %v207 = vsub.s32 %v203, %v206
        %vm208 = vcmp.lt.s32.totalorder %v207, 0
        %v209 = vsub.s32 0, %v207
        %v210 = vsel %vm208, %v209, %v207
        %v211 = vclz %v210
        %v212 = vsub.s32 %v211, 2
        %vm213 = vcmp.gt.s32.totalorder 0, %v212
        %v214 = vsel %vm213, 0, %v212
        %v215 = vsub.s32 32, %v214
        %v216 = vshll.u32 %v207, %v214
        %v217 = vshrl.u32 %v199, %v215
        %v218 = vor.u32 %v216, %v217
        %v219 = vsub.s32 4294967266, %v214
        %v220 = vadd.s32 %v219, 127
        %v221 = vshll.u32 %v220, 23
        %v222 = vor.u32 4788187, %v221
        %v223 = vand.u32 2147483647, %v222
        %v225 = vcvt.s32.f32 %v218
        %v226 = vmul.f32 %v225, %v223
        %v227 = vxor.u32 %v226, 2147483648
        %v228 = vsel %vm145, %v227, %v226
        %v229 = vsub.s32 4, %v205
        %v230 = vsel %vm145, %v229, %v205
        %v231 = vsel %vm144, %v141, %v228
        %v232 = vsel %vm144, 0, %v230
        %v233 = vcosq.f32.pop %v231
        %v234 = vsinq.f32.pop %v231
        %vm235 = vweird.f32 %v141
        %v236 = vadd.s32 %v232, 3
        %v237 = vand.u32 %v236, 3
        %vm238 = vcmp.lt.s32.totalorder %v237, 2
        %vm239 = vcmp.eq.s32.totalorder %v237, 0
        %v240 = vxor.u32 %v234, 2147483648
        %v241 = vsel %vm239, %v233, %v240
        %vm242 = vcmp.eq.s32.totalorder %v237, 2
        %v243 = vxor.u32 %v233, 2147483648
        %v244 = vsel %vm242, %v243, %v234
        %v245 = vsel %vm238, %v241, %v244
        %v246 = vsel %vm235, nan, %v245
        %v247 = vand.u32 2147483647, %v142
        %vm248 = vcmp.le.f32.partialorder %v247, 0.7853982
        %vm249 = vcmp.lt.s32.totalorder %v142, 0
        %v250 = vand.u32 %v142, 2139095040
        %v251 = vshrl.u32 %v250, 23
        %v252 = vsub.s32 %v251, 127
        %v253 = vand.u32 2147483647, %v142
        %v254 = vand.u32 %v253, 8388607
        %v255 = vor.u32 %v254, 8388608
        %v256 = vsub.s32 0, %v255
        %v257 = vadd.s32 %v252, 1
        %vm258 = vcmp.gt.s32.totalorder %v257, 0
        %v259 = vsel %vm258, %v257, 0
        %v260 = vshrl.u32 %v259, 5
        %v261 = vand.u32 %v259, 31
        %v262 = vsub.s32 32, %v261
        %v263 = vshrl.u32 683565275, %v262
        %v264 = vshll.u32 683565275, %v261
        %v265 = vshrl.u32 2475754826, %v262
        %v266 = vor.u32 %v264, %v265
        %v267 = vshll.u32 2475754826, %v261
        %v268 = vshrl.u32 2131351028, %v262
        %v269 = vor.u32 %v267, %v268
        %v270 = vshll.u32 2131351028, %v261
        %v271 = vshrl.u32 2102212464, %v262
        %v272 = vor.u32 %v270, %v271
        %v273 = vshll.u32 2102212464, %v261
        %v274 = vshrl.u32 920167782, %v262
        %v275 = vor.u32 %v273, %v274
        %v276 = vshll.u32 920167782, %v261
        %v277 = vshrl.u32 1326507024, %v262
        %v278 = vor.u32 %v276, %v277
        %vm279 = vcmp.lt.s32.totalorder %v260, 1
        %vm280 = vcmp.lt.s32.totalorder %v260, 2
        %vm281 = vcmp.lt.s32.totalorder %v260, 3
        %vm282 = vcmp.lt.s32.totalorder %v260, 4
        %v283 = vsel %vm279, %v263, %v266
        %v284 = vsel %vm282, %v272, 2102212464
        %v285 = vsel %vm281, %v269, %v284
        %v286 = vsel %vm280, %v283, %v285
        %v287 = vsel %vm279, %v266, %v269
        %v288 = vsel %vm282, %v275, 920167782
        %v289 = vsel %vm281, %v272, %v288
        %v290 = vsel %vm280, %v287, %v289
        %v291 = vsel %vm279, %v269, %v272
        %v292 = vsel %vm282, %v278, 1326507024
        %v293 = vsel %vm281, %v275, %v292
        %v294 = vsel %vm280, %v291, %v293
        %v295 = vshll.u32 %v255, 8
        %v296 = vmul.u32.u64.compose %v295, %v294
        %v297 = vextract.low.u32 %v296
        %v298 = vextract.high.u32 %v296
        %v299 = vmul.u32.u64.compose %v295, %v290
        %v300 = vextract.low.u32 %v299
        %v301 = vextract.high.u32 %v299
        %v302 = vmul.u32 %v295, %v286
        %v303 = vadd.s32 %v298, %v300
        %vm304 = vc.u32 %v298, %v300
        %v305 = vadd.s32 %v301, 1
        %v306 = vsel %vm304, %v305, %v301
        %v307 = vadd.s32 %v302, %v306
        %v308 = vadd.s32 %v307, 536870912
        %v309 = vshrl.u32 %v308, 30
        %v310 = vshll.u32 %v309, 30
        %v311 = vsub.s32 %v307, %v310
        %vm312 = vcmp.lt.s32.totalorder %v311, 0
        %v313 = vsub.s32 0, %v311
        %v314 = vsel %vm312, %v313, %v311
        %v315 = vclz %v314
        %v316 = vsub.s32 %v315, 2
        %vm317 = vcmp.gt.s32.totalorder 0, %v316
        %v318 = vsel %vm317, 0, %v316
        %v319 = vsub.s32 32, %v318
        %v320 = vshll.u32 %v311, %v318
        %v321 = vshrl.u32 %v303, %v319
        %v322 = vor.u32 %v320, %v321
        %v323 = vsub.s32 4294967266, %v318
        %v324 = vadd.s32 %v323, 127
        %v325 = vshll.u32 %v324, 23
        %v326 = vor.u32 4788187, %v325
        %v327 = vand.u32 2147483647, %v326
        %v329 = vcvt.s32.f32 %v322
        %v330 = vmul.f32 %v329, %v327
        %v331 = vxor.u32 %v330, 2147483648
        %v332 = vsel %vm249, %v331, %v330
        %v333 = vsub.s32 4, %v309
        %v334 = vsel %vm249, %v333, %v309
        %v335 = vsel %vm248, %v142, %v332
        %v336 = vsel %vm248, 0, %v334
        %v337 = vcosq.f32.pop %v335
        %v338 = vsinq.f32.pop %v335
        %vm339 = vweird.f32 %v142
        %v340 = vadd.s32 %v336, 3
        %v341 = vand.u32 %v340, 3
        %vm342 = vcmp.lt.s32.totalorder %v341, 2
        %vm343 = vcmp.eq.s32.totalorder %v341, 0
        %v344 = vxor.u32 %v338, 2147483648
        %v345 = vsel %vm343, %v337, %v344
        %vm346 = vcmp.eq.s32.totalorder %v341, 2
        %v347 = vxor.u32 %v337, 2147483648
        %v348 = vsel %vm346, %v347, %v338
        %v349 = vsel %vm342, %v345, %v348
        %v350 = vsel %vm339, nan, %v349
        %v351 = vand.u32 2147483647, %v141
        %vm352 = vcmp.le.f32.partialorder %v351, 0.7853982
        %vm353 = vcmp.lt.s32.totalorder %v141, 0
        %v354 = vand.u32 %v141, 2139095040
        %v355 = vshrl.u32 %v354, 23
        %v356 = vsub.s32 %v355, 127
        %v357 = vand.u32 2147483647, %v141
        %v358 = vand.u32 %v357, 8388607
        %v359 = vor.u32 %v358, 8388608
        %v360 = vsub.s32 0, %v359
        %v361 = vadd.s32 %v356, 1
        %vm362 = vcmp.gt.s32.totalorder %v361, 0
        %v363 = vsel %vm362, %v361, 0
        %v364 = vshrl.u32 %v363, 5
        %v365 = vand.u32 %v363, 31
        %v366 = vsub.s32 32, %v365
        %v367 = vshrl.u32 683565275, %v366
        %v368 = vshll.u32 683565275, %v365
        %v369 = vshrl.u32 2475754826, %v366
        %v370 = vor.u32 %v368, %v369
        %v371 = vshll.u32 2475754826, %v365
        %v372 = vshrl.u32 2131351028, %v366
        %v373 = vor.u32 %v371, %v372
        %v374 = vshll.u32 2131351028, %v365
        %v375 = vshrl.u32 2102212464, %v366
        %v376 = vor.u32 %v374, %v375
        %v377 = vshll.u32 2102212464, %v365
        %v378 = vshrl.u32 920167782, %v366
        %v379 = vor.u32 %v377, %v378
        %v380 = vshll.u32 920167782, %v365
        %v381 = vshrl.u32 1326507024, %v366
        %v382 = vor.u32 %v380, %v381
        %vm383 = vcmp.lt.s32.totalorder %v364, 1
        %vm384 = vcmp.lt.s32.totalorder %v364, 2
        %vm385 = vcmp.lt.s32.totalorder %v364, 3
        %vm386 = vcmp.lt.s32.totalorder %v364, 4
        %v387 = vsel %vm383, %v367, %v370
        %v388 = vsel %vm386, %v376, 2102212464
        %v389 = vsel %vm385, %v373, %v388
        %v390 = vsel %vm384, %v387, %v389
        %v391 = vsel %vm383, %v370, %v373
        %v392 = vsel %vm386, %v379, 920167782
        %v393 = vsel %vm385, %v376, %v392
        %v394 = vsel %vm384, %v391, %v393
        %v395 = vsel %vm383, %v373, %v376
        %v396 = vsel %vm386, %v382, 1326507024
        %v397 = vsel %vm385, %v379, %v396
        %v398 = vsel %vm384, %v395, %v397
        %v399 = vshll.u32 %v359, 8
        %v400 = vmul.u32.u64.compose %v399, %v398
        %v401 = vextract.low.u32 %v400
        %v402 = vextract.high.u32 %v400
        %v403 = vmul.u32.u64.compose %v399, %v394
        %v404 = vextract.low.u32 %v403
        %v405 = vextract.high.u32 %v403
        %v406 = vmul.u32 %v399, %v390
        %v407 = vadd.s32 %v402, %v404
        %vm408 = vc.u32 %v402, %v404
        %v409 = vadd.s32 %v405, 1
        %v410 = vsel %vm408, %v409, %v405
        %v411 = vadd.s32 %v406, %v410
        %v412 = vadd.s32 %v411, 536870912
        %v413 = vshrl.u32 %v412, 30
        %v414 = vshll.u32 %v413, 30
        %v415 = vsub.s32 %v411, %v414
        %vm416 = vcmp.lt.s32.totalorder %v415, 0
        %v417 = vsub.s32 0, %v415
        %v418 = vsel %vm416, %v417, %v415
        %v419 = vclz %v418
        %v420 = vsub.s32 %v419, 2
        %vm421 = vcmp.gt.s32.totalorder 0, %v420
        %v422 = vsel %vm421, 0, %v420
        %v423 = vsub.s32 32, %v422
        %v424 = vshll.u32 %v415, %v422
        %v425 = vshrl.u32 %v407, %v423
        %v426 = vor.u32 %v424, %v425
        %v427 = vsub.s32 4294967266, %v422
        %v428 = vadd.s32 %v427, 127
        %v429 = vshll.u32 %v428, 23
        %v430 = vor.u32 4788187, %v429
        %v431 = vand.u32 2147483647, %v430
        %v433 = vcvt.s32.f32 %v426
        %v434 = vmul.f32 %v433, %v431
        %v435 = vxor.u32 %v434, 2147483648
        %v436 = vsel %vm353, %v435, %v434
        %v437 = vsub.s32 4, %v413
        %v438 = vsel %vm353, %v437, %v413
        %v439 = vsel %vm352, %v141, %v436
        %v440 = vsel %vm352, 0, %v438
        %v441 = vcosq.f32.pop %v439
        %v442 = vsinq.f32.pop %v439
        %vm443 = vweird.f32 %v141
        %v444 = vand.u32 %v440, 3
        %vm445 = vcmp.lt.s32.totalorder %v444, 2
        %vm446 = vcmp.eq.s32.totalorder %v444, 0
        %v447 = vxor.u32 %v442, 2147483648
        %v448 = vsel %vm446, %v441, %v447
        %vm449 = vcmp.eq.s32.totalorder %v444, 2
        %v450 = vxor.u32 %v441, 2147483648
        %v451 = vsel %vm449, %v450, %v442
        %v452 = vsel %vm445, %v448, %v451
        %v453 = vsel %vm443, nan, %v452
        %v454 = vand.u32 2147483647, %v142
        %vm455 = vcmp.le.f32.partialorder %v454, 0.7853982
        %vm456 = vcmp.lt.s32.totalorder %v142, 0
        %v457 = vand.u32 %v142, 2139095040
        %v458 = vshrl.u32 %v457, 23
        %v459 = vsub.s32 %v458, 127
        %v460 = vand.u32 2147483647, %v142
        %v461 = vand.u32 %v460, 8388607
        %v462 = vor.u32 %v461, 8388608
        %v463 = vsub.s32 0, %v462
        %v464 = vadd.s32 %v459, 1
        %vm465 = vcmp.gt.s32.totalorder %v464, 0
        %v466 = vsel %vm465, %v464, 0
        %v467 = vshrl.u32 %v466, 5
        %v468 = vand.u32 %v466, 31
        %v469 = vsub.s32 32, %v468
        %v470 = vshrl.u32 683565275, %v469
        %v471 = vshll.u32 683565275, %v468
        %v472 = vshrl.u32 2475754826, %v469
        %v473 = vor.u32 %v471, %v472
        %v474 = vshll.u32 2475754826, %v468
        %v475 = vshrl.u32 2131351028, %v469
        %v476 = vor.u32 %v474, %v475
        %v477 = vshll.u32 2131351028, %v468
        %v478 = vshrl.u32 2102212464, %v469
        %v479 = vor.u32 %v477, %v478
        %v480 = vshll.u32 2102212464, %v468
        %v481 = vshrl.u32 920167782, %v469
        %v482 = vor.u32 %v480, %v481
        %v483 = vshll.u32 920167782, %v468
        %v484 = vshrl.u32 1326507024, %v469
        %v485 = vor.u32 %v483, %v484
        %vm486 = vcmp.lt.s32.totalorder %v467, 1
        %vm487 = vcmp.lt.s32.totalorder %v467, 2
        %vm488 = vcmp.lt.s32.totalorder %v467, 3
        %vm489 = vcmp.lt.s32.totalorder %v467, 4
        %v490 = vsel %vm486, %v470, %v473
        %v491 = vsel %vm489, %v479, 2102212464
        %v492 = vsel %vm488, %v476, %v491
        %v493 = vsel %vm487, %v490, %v492
        %v494 = vsel %vm486, %v473, %v476
        %v495 = vsel %vm489, %v482, 920167782
        %v496 = vsel %vm488, %v479, %v495
        %v497 = vsel %vm487, %v494, %v496
        %v498 = vsel %vm486, %v476, %v479
        %v499 = vsel %vm489, %v485, 1326507024
        %v500 = vsel %vm488, %v482, %v499
        %v501 = vsel %vm487, %v498, %v500
        %v502 = vshll.u32 %v462, 8
        %v503 = vmul.u32.u64.compose %v502, %v501
        %v504 = vextract.low.u32 %v503
        %v505 = vextract.high.u32 %v503
        %v506 = vmul.u32.u64.compose %v502, %v497
        %v507 = vextract.low.u32 %v506
        %v508 = vextract.high.u32 %v506
        %v509 = vmul.u32 %v502, %v493
        %v510 = vadd.s32 %v505, %v507
        %vm511 = vc.u32 %v505, %v507
        %v512 = vadd.s32 %v508, 1
        %v513 = vsel %vm511, %v512, %v508
        %v514 = vadd.s32 %v509, %v513
        %v515 = vadd.s32 %v514, 536870912
        %v516 = vshrl.u32 %v515, 30
        %v517 = vshll.u32 %v516, 30
        %v518 = vsub.s32 %v514, %v517
        %vm519 = vcmp.lt.s32.totalorder %v518, 0
        %v520 = vsub.s32 0, %v518
        %v521 = vsel %vm519, %v520, %v518
        %v522 = vclz %v521
        %v523 = vsub.s32 %v522, 2
        %vm524 = vcmp.gt.s32.totalorder 0, %v523
        %v525 = vsel %vm524, 0, %v523
        %v526 = vsub.s32 32, %v525
        %v527 = vshll.u32 %v518, %v525
        %v528 = vshrl.u32 %v510, %v526
        %v529 = vor.u32 %v527, %v528
        %v530 = vsub.s32 4294967266, %v525
        %v531 = vadd.s32 %v530, 127
        %v532 = vshll.u32 %v531, 23
        %v533 = vor.u32 4788187, %v532
        %v534 = vand.u32 2147483647, %v533
        %v536 = vcvt.s32.f32 %v529
        %v537 = vmul.f32 %v536, %v534
        %v538 = vxor.u32 %v537, 2147483648
        %v539 = vsel %vm456, %v538, %v537
        %v540 = vsub.s32 4, %v516
        %v541 = vsel %vm456, %v540, %v516
        %v542 = vsel %vm455, %v142, %v539
        %v543 = vsel %vm455, 0, %v541
        %v544 = vcosq.f32.pop %v542
        %v545 = vsinq.f32.pop %v542
        %vm546 = vweird.f32 %v142
        %v547 = vand.u32 %v543, 3
        %vm548 = vcmp.lt.s32.totalorder %v547, 2
        %vm549 = vcmp.eq.s32.totalorder %v547, 0
        %v550 = vxor.u32 %v545, 2147483648
        %v551 = vsel %vm549, %v544, %v550
        %vm552 = vcmp.eq.s32.totalorder %v547, 2
        %v553 = vxor.u32 %v544, 2147483648
        %v554 = vsel %vm552, %v553, %v545
        %v555 = vsel %vm548, %v551, %v554
        %v556 = vsel %vm546, nan, %v555
        %557 = vst [vmem:[%s128] sm:$0xff] %v246
        %558 = vst [vmem:[%s128 + $0x8] sm:$0xff] %v350
        %559 = vst [vmem:[%s128 + $0x10] sm:$0xff] %v453
        %560 = vst [vmem:[%s128 + $0x18] sm:$0xff] %v556
        %s561 = sand.u32 %s68, 1
        %s562 = sand.u32 %s68, 1
        %s563 = smul.addr %s562, 32
        %s564 = scalar_lea.vmem [#allocation2], %s563
        // Predicated region
        $region29: #{positional_encoding_vector.1} parent=27 // pred_check
          %p565 = pneg %p78
        $region30: #{positional_encoding_vector.1} parent=27 // pred_check_branch
          %567 = sbr.rel (%p565) target = $region32
        $region31: #{positional_encoding_vector.1} parent=27 // pred_region
          %s568 = smul.addr %s13, 8
          %s569 = scalar_lea.vmem %s2, %s568
          // Predicated region
          $region33: #{positional_encoding_vector.1} parent=31 // pred_check
            _
          $region34: #{positional_encoding_vector.1} parent=31 // pred_check_branch
            %571 = sbr.rel (0) target = $region36
          $region35: #{positional_encoding_vector.1} parent=31 // pred_region
            // Predicated region
            $region37: #{positional_encoding_vector.1} parent=35 // pred_check
              _
            $region38: #{positional_encoding_vector.1} parent=35 // pred_check_branch
              %573 = sbr.rel (0) target = $region40
            $region39: #{positional_encoding_vector.1} parent=35 // pred_region
              // Predicated region
              $region52: #{positional_encoding_vector.1} parent=39 // pred_check
                _
              $region53: #{positional_encoding_vector.1} parent=39 // pred_check_branch
                %595 = sbr.rel (0) target = $region55
              $region54: #{positional_encoding_vector.1} parent=39 // pred_region
                loop: start=0, step=1, limit=1
                $region56: #{positional_encoding_vector.1} parent=54 // loop_pre_header
                  _
                $region57: #{positional_encoding_vector.1} parent=54 // loop_header
                  %s597 = sphi 0, %s601
                  %p598 = scmp.ge.s32.totalorder %s597, 1
                  %s602 = sphi %s564, %s564
                  %s603 = sphi %s569, %s569
                $region58: #{positional_encoding_vector.1} parent=54 // loop_header_branch
                  %600 = sbr.rel (%p598) target = $region62
                $region59: #{positional_encoding_vector.1} parent=54 // loop_body
                  %v604 = vld [vmem:[%s602] sm:$0xff]
                  %605 = vst [vmem:[%s603] sm:$0xff] %v604
                  %v606 = vld [vmem:[%s602 + $0x8] sm:$0xff]
                  %607 = vst [vmem:[%s603 + $0x10] sm:$0xff] %v606
                  %v608 = vld [vmem:[%s602 + $0x10] sm:$0xff]
                  %609 = vst [vmem:[%s603 + $0x20] sm:$0xff] %v608
                  %v610 = vld [vmem:[%s602 + $0x18] sm:$0xff]
                  %611 = vst [vmem:[%s603 + $0x30] sm:$0xff] %v610
                $region60: #{positional_encoding_vector.1} parent=54 // loop_footer
                  %s601 = sadd.s32 1, %s597
                $region61: #{positional_encoding_vector.1} parent=54 // loop_footer_branch
                  %596 = sbr.rel target = $region57
                $region62: #{positional_encoding_vector.1} parent=54 // loop_exit
                  _
              $region55: #{positional_encoding_vector.1} parent=39 // pred_fallthru
                _
              // Predicated region
              $region63: #{positional_encoding_vector.1} parent=39 // pred_check
                _
              $region64: #{positional_encoding_vector.1} parent=39 // pred_check_branch
                %613 = sbr.rel target = $region66
              $region65: #{positional_encoding_vector.1} parent=39 // pred_region
                _
              $region66: #{positional_encoding_vector.1} parent=39 // pred_fallthru
                _
            $region40: #{positional_encoding_vector.1} parent=35 // pred_fallthru
              _
            // Predicated region
            $region41: #{positional_encoding_vector.1} parent=35 // pred_check
              _
            $region42: #{positional_encoding_vector.1} parent=35 // pred_check_branch
              %575 = sbr.rel target = $region44
            $region43: #{positional_encoding_vector.1} parent=35 // pred_region
              %s577 = ssub.s32 256, 1
              loop: start=0, step=1, limit=1
              $region45: #{positional_encoding_vector.1} parent=43 // loop_pre_header
                _
              $region46: #{positional_encoding_vector.1} parent=43 // loop_header
                %s579 = sphi 0, %s583
                %p580 = scmp.ge.s32.totalorder %s579, 1
                %s584 = sphi %s564, %s564
                %s585 = sphi %s569, %s569
              $region47: #{positional_encoding_vector.1} parent=43 // loop_header_branch
                %582 = sbr.rel (%p580) target = $region51
              $region48: #{positional_encoding_vector.1} parent=43 // loop_body
                %v586 = vld [vmem:[%s584] sm:%s577]
                %587 = vst [vmem:[%s585] sm:%s577] %v586
                %v588 = vld [vmem:[%s584 + $0x8] sm:%s577]
                %589 = vst [vmem:[%s585 + $0x10] sm:%s577] %v588
                %v590 = vld [vmem:[%s584 + $0x10] sm:%s577]
                %591 = vst [vmem:[%s585 + $0x20] sm:%s577] %v590
                %v592 = vld [vmem:[%s584 + $0x18] sm:%s577]
                %593 = vst [vmem:[%s585 + $0x30] sm:%s577] %v592
              $region49: #{positional_encoding_vector.1} parent=43 // loop_footer
                %s583 = sadd.s32 1, %s579
              $region50: #{positional_encoding_vector.1} parent=43 // loop_footer_branch
                %578 = sbr.rel target = $region46
              $region51: #{positional_encoding_vector.1} parent=43 // loop_exit
                _
            $region44: #{positional_encoding_vector.1} parent=35 // pred_fallthru
              _
          $region36: #{positional_encoding_vector.1} parent=31 // pred_fallthru
            _
          %614 = vnop
        $region32: #{positional_encoding_vector.1} parent=27 // pred_fallthru
          _
      $region28: #{positional_encoding_vector.1} parent=5 // pred_fallthru
        _
      %p615 = scmp.le.s32.totalorder 2, %s8
      // Predicated region
      $region67: #{positional_encoding_vector.1} parent=5 // pred_check
        %p616 = pneg %p615
      $region68: #{positional_encoding_vector.1} parent=5 // pred_check_branch
        %618 = sbr.rel (%p616) target = $region70
      $region69: #{positional_encoding_vector.1} parent=5 // pred_region
        %s619 = ssub.s32 %s8, 2
        // Predicated region
        $region71: #{positional_encoding_vector.1} parent=69 // pred_check
          %p620 = pneg %p84
        $region72: #{positional_encoding_vector.1} parent=69 // pred_check_branch
          %622 = sbr.rel (%p620) target = $region74
        $region73: #{positional_encoding_vector.1} parent=69 // pred_region
          %s623 = sand.u32 %s69, 1
          %s624 = sand.u32 %s69, 1
          %s625 = smul.addr %s624, 32
          %s626 = scalar_lea.vmem [#allocation2], %s625
        $region74: #{positional_encoding_vector.1} parent=69 // pred_fallthru
          _
      $region70: #{positional_encoding_vector.1} parent=5 // pred_fallthru
        _
    $region6: #{positional_encoding_vector.1} parent=1 // loop_footer
      %s12 = sadd.s32 1, %s8
    $region7: #{positional_encoding_vector.1} parent=1 // loop_footer_branch
      %7 = sbr.rel target = $region3
    $region8: #{positional_encoding_vector.1} parent=1 // loop_exit
      _

</llo_original>
